<compile_context>
chip_gen: v6e
topology: v6e:2x2x1
jax: 0.10.0
libtpu: 0.0.40
codegen_flags: <defaults>
</compile_context>

<pallas_src>
import math

import jax
import jax.numpy as jnp
from jax.experimental import pallas as pl
from jax.experimental.pallas import tpu as pltpu


def _get_pad(size: int, multiple: int):
    new_size = math.ceil(size / multiple) * multiple
    pad_size = new_size - size
    pad_left = pad_size // 2
    pad_right = pad_size - pad_left
    return pad_left, pad_right


# Total bytes allowed for double-buffered (in + out) blocks.  Kept under the
# smallest default scoped-VMEM budget across v5e/v6e/v7x, with headroom for
# Mosaic's internal scratch.
_VMEM_BLOCK_BUDGET_BYTES = 12 * 1024 * 1024


def _choose_block_planes(nc: int, bytes_per_plane: int):
    """Pick how many (H, W) planes each grid step processes.

    Returns (block_planes, divides_evenly).
    """
    cap = max(1, _VMEM_BLOCK_BUDGET_BYTES // (2 * bytes_per_plane))
    cap = min(cap, nc)
    if nc >= 2:
        # Keep >= 2 grid steps so v7x can shard across both TensorCores.
        cap = min(cap, pl.cdiv(nc, 2))
    # Prefer an exact divisor of nc (no masked tail block / no revisits).
    best_div = 1
    for b in range(cap, 0, -1):
        if nc % b == 0:
            best_div = b
            break
    if 2 * best_div >= cap:
        return best_div, True
    # Divisors are all tiny (e.g. nc is a large prime): fall back to the
    # VMEM-sized block and let Pallas mask the tail block's OOB writes.
    return cap, False


def _pad_block(x, pads_hw, dtype):
    """Build the padded (bnc, Hp, Wp) tile entirely in registers."""
    (pad_top, pad_bot), (pad_left, pad_right) = pads_hw
    bnc, h, w = x.shape
    # Pad W (lane dim) via concatenation with zero strips.
    if pad_left or pad_right:
        parts = []
        if pad_left:
            parts.append(jnp.zeros((bnc, h, pad_left), dtype))
        parts.append(x)
        if pad_right:
            parts.append(jnp.zeros((bnc, h, pad_right), dtype))
        x = jnp.concatenate(parts, axis=2)
    wp = w + pad_left + pad_right
    # Pad H (sublane dim).
    if pad_top or pad_bot:
        parts = []
        if pad_top:
            parts.append(jnp.zeros((bnc, pad_top, wp), dtype))
        parts.append(x)
        if pad_bot:
            parts.append(jnp.zeros((bnc, pad_bot, wp), dtype))
        x = jnp.concatenate(parts, axis=1)
    return x


def center_padding(x: jax.Array, multiple: int) -> jax.Array:
    """Pallas implementation of CenterPadding.forward for NCHW inputs."""
    # TODO(synk): only the 4D NCHW case (pad H and W) is implemented; the
    # PyTorch module is rank-generic but DINOv2 only feeds it NCHW images.
    assert x.ndim == 4, "center_padding expects NCHW input"
    N, C, H, W = x.shape
    pad_top, pad_bot = _get_pad(H, multiple)
    pad_left, pad_right = _get_pad(W, multiple)

    # Early exit: nothing to pad -> no kernel launch, no HBM traffic.
    if pad_top == pad_bot == pad_left == pad_right == 0:
        return x

    Hp = H + pad_top + pad_bot
    Wp = W + pad_left + pad_right
    nc = N * C
    itemsize = jnp.dtype(x.dtype).itemsize

    bytes_per_plane = (H * W + Hp * Wp) * itemsize
    bnc, divides = _choose_block_planes(nc, bytes_per_plane)
    grid = (nc // bnc if divides else pl.cdiv(nc, bnc),)

    xf = x.reshape(nc, H, W)
    pads_hw = ((pad_top, pad_bot), (pad_left, pad_right))

    def kernel(x_ref, o_ref):
        # Build the padded tile in registers, then one aligned full-block store.
        o_ref[...] = _pad_block(x_ref[...], pads_hw, o_ref.dtype)

    # Pure data movement: advise XLA it is bandwidth-bound.
    cost = pl.CostEstimate(
        flops=0,
        transcendentals=0,
        bytes_accessed=(nc * H * W + nc * Hp * Wp) * itemsize,
    )

    out = pl.pallas_call(
        kernel,
        out_shape=jax.ShapeDtypeStruct((nc, Hp, Wp), x.dtype),
        grid=grid,
        in_specs=[pl.BlockSpec((bnc, H, W), lambda i: (i, 0, 0))],
        out_specs=pl.BlockSpec((bnc, Hp, Wp), lambda i: (i, 0, 0)),
        compiler_params=pltpu.CompilerParams(
            dimension_semantics=("parallel",)),
        cost_estimate=cost,
    )(xf)

    return out.reshape(N, C, Hp, Wp)


def _ref_center_padding(x, multiple):
    pt, pb = _get_pad(x.shape[2], multiple)
    pleft, pright = _get_pad(x.shape[3], multiple)
    return jnp.pad(x, ((0, 0), (0, 0), (pt, pb), (pleft, pright)))


if __name__ == "__main__":
    key = jax.random.PRNGKey(0)
    multiple = 14  # DINOv2 patch size

    # Case 1: small NCHW input needing padding on both H and W.
    N, C, H, W = 2, 4, 16, 16
    x = jax.random.normal(key, (N, C, H, W), dtype=jnp.float32)
    out = jax.block_until_ready(center_padding(x, multiple))
    ref = _ref_center_padding(x, multiple)
    assert out.shape == ref.shape, (out.shape, ref.shape)
    assert out.dtype == x.dtype
    assert bool(jnp.array_equal(out, ref))

    # Case 2: no-pad early-exit path (H, W already multiples of 14).
    x2 = jax.random.normal(key, (1, 2, 28, 28), dtype=jnp.float32)
    out2 = jax.block_until_ready(center_padding(x2, multiple))
    assert out2.shape == x2.shape
    assert bool(jnp.array_equal(out2, x2))

    # Case 3: odd plane count + bf16 (exercises divisor-based blocking and
    # sub-32-bit packing).
    x3 = jax.random.normal(key, (1, 3, 20, 22), dtype=jnp.bfloat16)
    out3 = jax.block_until_ready(center_padding(x3, multiple))
    ref3 = _ref_center_padding(x3, multiple)
    assert out3.shape == ref3.shape
    assert out3.dtype == x3.dtype
    assert bool(jnp.array_equal(out3, ref3))

    print("KERNEL_OK")
</pallas_src>

<mosaic_0001>
module attributes {stable_mosaic.version = 11 : i64} {
  func.func @kernel(%arg0: i32, %arg1: memref<4x16x16xf32, #tpu.memory_space<vmem>>, %arg2: memref<4x28x28xf32, #tpu.memory_space<vmem>>) attributes {dimension_semantics = [#tpu.dimension_semantics<parallel>], iteration_bounds = array<i64: 2>, scalar_prefetch = 0 : i64, scratch_operands = 0 : i64, tpu.core_type = #tpu.core_type<tc>, window_params = [{transform_indices = @transform_0, window_bounds = array<i64: 4, 16, 16>}, {transform_indices = @transform_1, window_bounds = array<i64: 4, 28, 28>}]} {
    %c0 = arith.constant 0 : index
    %c0_0 = arith.constant 0 : index
    %c0_1 = arith.constant 0 : index
    %0 = vector.load %arg1[%c0, %c0_0, %c0_1] : memref<4x16x16xf32, #tpu.memory_space<vmem>>, vector<4x16x16xf32>
    %cst = arith.constant 0.000000e+00 : f32
    %1 = vector.broadcast %cst : f32 to vector<4x16x6xf32>
    %cst_2 = arith.constant 0.000000e+00 : f32
    %2 = vector.broadcast %cst_2 : f32 to vector<4x16x6xf32>
    %3 = tpu.concatenate %1, %0, %2 in 2 : vector<4x16x6xf32>, vector<4x16x16xf32>, vector<4x16x6xf32> -> vector<4x16x28xf32>
    %cst_3 = arith.constant 0.000000e+00 : f32
    %4 = vector.broadcast %cst_3 : f32 to vector<4x6x28xf32>
    %cst_4 = arith.constant 0.000000e+00 : f32
    %5 = vector.broadcast %cst_4 : f32 to vector<4x6x28xf32>
    %6 = tpu.concatenate %4, %3, %5 in 1 : vector<4x6x28xf32>, vector<4x16x28xf32>, vector<4x6x28xf32> -> vector<4x28x28xf32>
    %c0_5 = arith.constant 0 : index
    %c0_6 = arith.constant 0 : index
    %c0_7 = arith.constant 0 : index
    %7 = vector.load %arg2[%c0_5, %c0_6, %c0_7] : memref<4x28x28xf32, #tpu.memory_space<vmem>>, vector<4x28x28xf32>
    tpu.vector_store %arg2[%c0_5, %c0_6, %c0_7], %6 {strides = array<i32>} : memref<4x28x28xf32, #tpu.memory_space<vmem>>, vector<4x28x28xf32>,
    return
  }
  func.func @transform_0(%arg0: i32) -> (i32, i32, i32) {
    %c0_i32 = arith.constant 0 : i32
    %c0_i32_0 = arith.constant 0 : i32
    %c0_i32_1 = arith.constant 0 : i32
    return %arg0, %c0_i32, %c0_i32_0 : i32, i32, i32
  }
  func.func @transform_1(%arg0: i32) -> (i32, i32, i32) {
    %c0_i32 = arith.constant 0 : i32
    %c0_i32_0 = arith.constant 0 : i32
    %c0_i32_1 = arith.constant 0 : i32
    return %arg0, %c0_i32, %c0_i32_0 : i32, i32, i32
  }
}

</mosaic_0001>

<llo_original>
// kernel: tpu_custom_call.1
$region0: #{tpu_custom_call.1}
  #allocation0 [shape = 'u32[]', space=smem, size = 0x4, offset = 0x4, fixed_abs, tag = 'smem constant byte address 0x4 - core index']
  #allocation1 [shape = 'u32[144,128]{1,0:T(1,128)}', space=vmem, size = 0x12000, scoped, tag = 'internal scratch']
  %s0 = inlined_call_operand.hbm [shape: f32[8,16,16], index: 0, kind: input, shape index: {}]
  %s1 = inlined_call_operand.vmem [shape: f32[8,28,28], index: 1, kind: output, shape index: {}]
  %s2 = sld [smem:[#allocation0]]
  $region41: #{tpu_custom_call.1} parent=0
    _
  %s4 = ssub.s32 1, %s2
  %s5 = scalar_select 0, %s4, %s2
  $region1: #{tpu_custom_call.1} parent=0
    #allocation2 [shape = 'u8[65536]{0}', space=vmem, size = 0x10000, scoped, tag = 'input window, operand 0']
    #allocation3 [shape = 's32[2]{0}', space=sflag, size = 0x8, scoped, tag = 'scoped memory for tpu_custom_call.1']
    %6 = vsyncpa [#allocation3], 0
    %s7 = scalar_lea.sflag [#allocation3], 1
    %8 = vsyncpa %s7, 0
    loop: start=0, step=1, limit=4
    $region2: #{tpu_custom_call.1} parent=1 // loop_pre_header
      _
    $region3: #{tpu_custom_call.1} parent=1 // loop_header
      %s10 = sphi 0, %s14
      %p11 = scmp.ge.s32.totalorder %s10, 4
      %s20 = sphi 0, %s22
      %s23 = sphi 0, %s20
      %s24 = sphi 0, %s23
      %s40 = sphi 0, %s24
      %s46 = sphi 0, %s48
      %s49 = sphi 0, %s46
      %s50 = sphi 0, %s49
      %s66 = sphi 0, %s50
    $region4: #{tpu_custom_call.1} parent=1 // loop_header_branch
      %13 = sbr.rel (%p11) target = $region8
    $region5: #{tpu_custom_call.1} parent=1 // loop_body
      %s15 = ssub.s32 %s10, 1
      %s16 = ssub.s32 %s10, 2
      %s17 = sadd.s32 %s10, 1
      %s18 = ssub.s32 %s10, %s17
      %p19 = scmp.eq.s32.totalorder %s18, 0
      %s21 = sadd.s32 %s20, 1
      %s22 = scalar_select %p19, %s20, %s21
      %p25 = pneg %p19
      %p26 = scmp.eq.s32.totalorder %s10, 1
      %p27 = por %p25, %p26
      %p28 = scmp.ne.s32.totalorder %s20, %s23
      %p29 = scmp.eq.s32.totalorder %s10, 0
      %p30 = por %p28, %p29
      %p31 = scmp.ne.s32.totalorder %s20, %s23
      %p32 = scmp.eq.s32.totalorder %s15, 1
      %p33 = por %p31, %p32
      %p34 = scmp.ne.s32.totalorder %s23, %s24
      %p35 = scmp.eq.s32.totalorder %s15, 0
      %p36 = por %p34, %p35
      %p37 = scmp.ne.s32.totalorder %s23, %s24
      %p38 = scmp.eq.s32.totalorder %s16, 1
      %p39 = por %p37, %p38
      %p41 = scmp.ne.s32.totalorder %s24, %s40
      %p42 = scmp.eq.s32.totalorder %s16, 0
      %p43 = por %p41, %p42
      %s44 = ssub.s32 %s10, %s17
      %p45 = scmp.eq.s32.totalorder %s44, 0
      %s47 = sadd.s32 %s46, 1
      %s48 = scalar_select %p45, %s46, %s47
      %p51 = pneg %p45
      %p52 = scmp.eq.s32.totalorder %s10, 1
      %p53 = por %p51, %p52
      %p54 = scmp.ne.s32.totalorder %s46, %s49
      %p55 = scmp.eq.s32.totalorder %s10, 0
      %p56 = por %p54, %p55
      %p57 = scmp.ne.s32.totalorder %s46, %s49
      %p58 = scmp.eq.s32.totalorder %s15, 1
      %p59 = por %p57, %p58
      %p60 = scmp.ne.s32.totalorder %s49, %s50
      %p61 = scmp.eq.s32.totalorder %s15, 0
      %p62 = por %p60, %p61
      %p63 = scmp.ne.s32.totalorder %s49, %s50
      %p64 = scmp.eq.s32.totalorder %s16, 1
      %p65 = por %p63, %p64
      %p67 = scmp.ne.s32.totalorder %s50, %s66
      %p68 = scmp.eq.s32.totalorder %s16, 0
      %p69 = por %p67, %p68
      %p70 = scmp.le.s32.totalorder 1, %s10
      %p71 = scmp.lt.s32.totalorder %s10, 3
      %p72 = pnand %p70, %p71
      %p73 = pneg %p72
      // Predicated region
      $region9: #{tpu_custom_call.1} parent=5 // pred_check
        _
      $region10: #{tpu_custom_call.1} parent=5 // pred_check_branch
        %75 = sbr.rel (%p72) target = $region12
      $region11: #{tpu_custom_call.1} parent=5 // pred_region
        %s76 = ssub.s32 %s10, 1
      $region12: #{tpu_custom_call.1} parent=5 // pred_fallthru
        _
      %p77 = scmp.lt.s32.totalorder %s10, 2
      // Predicated region
      $region13: #{tpu_custom_call.1} parent=5 // pred_check
        %p78 = pneg %p77
      $region14: #{tpu_custom_call.1} parent=5 // pred_check_branch
        %80 = sbr.rel (%p78) target = $region16
      $region15: #{tpu_custom_call.1} parent=5 // pred_region
        // Predicated region
        $region17: #{tpu_custom_call.1} parent=15 // pred_check
          %p81 = pneg %p30
        $region18: #{tpu_custom_call.1} parent=15 // pred_check_branch
          %83 = sbr.rel (%p81) target = $region20
        $region19: #{tpu_custom_call.1} parent=15 // pred_region
          %s84 = sand.u32 %s20, 1
          %s85 = scalar_lea.sflag [#allocation3], %s84
          %s86 = sand.u32 %s20, 1
          %s87 = smul.addr %s86, 64
          %s88 = scalar_lea.vmem [#allocation2], %s87
          %s89 = smul.u32 4, %s10
          %s91 = ssub.s32 1024, 1024
          %92 = vsyncadd %s85, %s91
          %s93 = smul.addr %s89, 2
          %s94 = smul.addr %s93, 128
          %s95 = scalar_lea.hbm %s0, %s94
          %s96 = sshll.u32 %s88, 4
          %s97 = int_to_ptr.vmem [resolvable:$true] %s96
          %102 = dma.hbm_to_vmem [thread:$0]  %s95, 1024, %s97, %s85, 128, 128, 8
        $region20: #{tpu_custom_call.1} parent=15 // pred_fallthru
          _
      $region16: #{tpu_custom_call.1} parent=5 // pred_fallthru
        _
      %p103 = scmp.le.s32.totalorder 1, %s10
      %p104 = scmp.lt.s32.totalorder %s10, 3
      %p105 = pnand %p103, %p104
      %p106 = pneg %p105
      // Predicated region
      $region21: #{tpu_custom_call.1} parent=5 // pred_check
        _
      $region22: #{tpu_custom_call.1} parent=5 // pred_check_branch
        %108 = sbr.rel (%p105) target = $region24
      $region23: #{tpu_custom_call.1} parent=5 // pred_region
        %s109 = ssub.s32 %s10, 1
        %s110 = sand.u32 %s23, 1
        %s111 = scalar_lea.sflag [#allocation3], %s110
        %s112 = sand.u32 %s23, 1
        %s113 = smul.addr %s112, 64
        %s114 = scalar_lea.vmem [#allocation2], %s113
        // Predicated region
        $region25: #{tpu_custom_call.1} parent=23 // pred_check
          %p115 = pneg %p36
        $region26: #{tpu_custom_call.1} parent=23 // pred_check_branch
          %117 = sbr.rel (%p115) target = $region28
        $region27: #{tpu_custom_call.1} parent=23 // pred_region
          %118 = dma.done %s111, 1024
        $region28: #{tpu_custom_call.1} parent=23 // pred_fallthru
          _
        %s119 = sand.u32 %s23, 1
        %s120 = scalar_lea.sflag [#allocation3], %s119
        %s121 = sand.u32 %s23, 1
        %s122 = smul.addr %s121, 64
        %s123 = scalar_lea.vmem [#allocation2], %s122
        %p124 = pneg %p36
        %p125 = pneg %p33
        %p126 = pneg %p62
        %p127 = pneg %p59
        %s128 = smul.u32 4, %s15
        %p129 = scmp.lt.s32.totalorder %s128, 7
        %s130 = scalar_select %p129, %s128, 7
        %s131 = smul.addr %s130, 4
        %s132 = smul.addr %s131, 8
        %s133 = scalar_lea.vmem %s1, %s132
        %s134 = smul.u32 4, %s15
        %s135 = smul.u32 4, %s15
        %p136 = scmp.lt.s32.totalorder %s135, 7
        %s137 = scalar_select %p136, %s135, 7
        %s138 = smul.addr %s137, 4
        %s139 = smul.addr %s138, 8
        %s140 = scalar_lea.vmem %s1, %s139
        %s141 = smul.u32 4, %s15
        %v142 = vld [vmem:[%s114] sm:$0xff]
        %v143 = vld [vmem:[%s114 + $0x8] sm:$0xff]
        %v144 = vld [vmem:[%s114 + $0x10] sm:$0xff]
        %v145 = vld [vmem:[%s114 + $0x18] sm:$0xff]
        %v146 = vld [vmem:[%s114 + $0x20] sm:$0xff]
        %v147 = vld [vmem:[%s114 + $0x28] sm:$0xff]
        %v148 = vld [vmem:[%s114 + $0x30] sm:$0xff]
        %v149 = vld [vmem:[%s114 + $0x38] sm:$0xff]
        %158 = vrot.lane.b32.xlu0 %v142, 6
        %v159 = vpop.permute.xlu0 %158
        %160 = vrot.lane.b32.xlu0 %v143, 6
        %v161 = vpop.permute.xlu0 %160
        %162 = vrot.lane.b32.xlu0 %v144, 6
        %v163 = vpop.permute.xlu0 %162
        %164 = vrot.lane.b32.xlu0 %v145, 6
        %v165 = vpop.permute.xlu0 %164
        %166 = vrot.lane.b32.xlu0 %v146, 6
        %v167 = vpop.permute.xlu0 %166
        %168 = vrot.lane.b32.xlu0 %v147, 6
        %v169 = vpop.permute.xlu0 %168
        %170 = vrot.lane.b32.xlu0 %v148, 6
        %v171 = vpop.permute.xlu0 %170
        %172 = vrot.lane.b32.xlu0 %v149, 6
        %v173 = vpop.permute.xlu0 %172
        %vm182 = vcmask 48128
        %v183 = vsel %vm182, 0.0, %v159
        %v184 = vsel %vm182, 0.0, %v161
        %v185 = vsel %vm182, 0.0, %v163
        %v186 = vsel %vm182, 0.0, %v165
        %v187 = vsel %vm182, 0.0, %v167
        %v188 = vsel %vm182, 0.0, %v169
        %v189 = vsel %vm182, 0.0, %v171
        %v190 = vsel %vm182, 0.0, %v173
        %vm191 = vcmask 179200
        %v192 = vsel %vm191, %v183, 0.0
        %v193 = vsel %vm191, %v184, 0.0
        %v194 = vsel %vm191, %v185, 0.0
        %v195 = vsel %vm191, %v186, 0.0
        %v196 = vsel %vm191, %v187, 0.0
        %v197 = vsel %vm191, %v188, 0.0
        %v198 = vsel %vm191, %v189, 0.0
        %v199 = vsel %vm191, %v190, 0.0
        %vm208 = vcmask 1045504
        %v209 = vrot.slane %v192, 2
        %v210 = vrot.slane %v193, 2
        %v211 = vsel %vm208, %v209, %v210
        %v212 = vrot.slane %v194, 2
        %v213 = vrot.slane %v195, 2
        %v214 = vsel %vm208, %v212, %v213
        %v215 = vrot.slane %v196, 2
        %v216 = vrot.slane %v197, 2
        %v217 = vsel %vm208, %v215, %v216
        %v218 = vrot.slane %v198, 2
        %v219 = vrot.slane %v199, 2
        %v220 = vsel %vm208, %v218, %v219
        %v233 = vsel %vm208, 0.0, %v209
        %v234 = vsel %vm208, 0.0, %v212
        %v235 = vsel %vm208, 0.0, %v215
        %v236 = vsel %vm208, 0.0, %v218
        %v237 = vsel %vm208, %v210, 0.0
        %v238 = vsel %vm208, %v213, 0.0
        %v239 = vsel %vm208, %v216, 0.0
        %v240 = vsel %vm208, %v219, 0.0
        %vm241 = vcmask 228352
        %242 = vst.msk [vmem:[%s140] sm:$0xff] %vm241, %v233
        %243 = vst.msk [vmem:[%s140 + $0x8] sm:$0xff] %vm241, %v211
        %244 = vst.msk [vmem:[%s140 + $0x10] sm:$0xff] %vm241, %v237
        %vm245 = vcmask 224256
        %246 = vst.msk [vmem:[%s140 + $0x18] sm:$0xf] %vm245, 0.0
        %247 = vst.msk [vmem:[%s140 + $0x20] sm:$0xff] %vm241, %v234
        %248 = vst.msk [vmem:[%s140 + $0x28] sm:$0xff] %vm241, %v214
        %249 = vst.msk [vmem:[%s140 + $0x30] sm:$0xff] %vm241, %v238
        %250 = vst.msk [vmem:[%s140 + $0x38] sm:$0xf] %vm245, 0.0
        %251 = vst.msk [vmem:[%s140 + $0x40] sm:$0xff] %vm241, %v235
        %252 = vst.msk [vmem:[%s140 + $0x48] sm:$0xff] %vm241, %v217
        %253 = vst.msk [vmem:[%s140 + $0x50] sm:$0xff] %vm241, %v239
        %254 = vst.msk [vmem:[%s140 + $0x58] sm:$0xf] %vm245, 0.0
        %255 = vst.msk [vmem:[%s140 + $0x60] sm:$0xff] %vm241, %v236
        %256 = vst.msk [vmem:[%s140 + $0x68] sm:$0xff] %vm241, %v220
        %257 = vst.msk [vmem:[%s140 + $0x70] sm:$0xff] %vm241, %v240
        %258 = vst.msk [vmem:[%s140 + $0x78] sm:$0xf] %vm245, 0.0
        %s259 = smul.u32 4, %s15
        %p260 = scmp.lt.s32.totalorder %s259, 7
        %s261 = scalar_select %p260, %s259, 7
        %s262 = smul.addr %s261, 4
        %s263 = smul.addr %s262, 8
        %s264 = scalar_lea.vmem %s1, %s263
        // Predicated region
        $region29: #{tpu_custom_call.1} parent=23 // pred_check
          %p265 = pneg %p59
        $region30: #{tpu_custom_call.1} parent=23 // pred_check_branch
          %267 = sbr.rel (%p265) target = $region32
        $region31: #{tpu_custom_call.1} parent=23 // pred_region
          %s268 = smul.u32 4, %s15
        $region32: #{tpu_custom_call.1} parent=23 // pred_fallthru
          _
      $region24: #{tpu_custom_call.1} parent=5 // pred_fallthru
        _
      %p269 = scmp.le.s32.totalorder 2, %s10
      // Predicated region
      $region33: #{tpu_custom_call.1} parent=5 // pred_check
        %p270 = pneg %p269
      $region34: #{tpu_custom_call.1} parent=5 // pred_check_branch
        %272 = sbr.rel (%p270) target = $region36
      $region35: #{tpu_custom_call.1} parent=5 // pred_region
        %s273 = ssub.s32 %s10, 2
        // Predicated region
        $region37: #{tpu_custom_call.1} parent=35 // pred_check
          %p274 = pneg %p65
        $region38: #{tpu_custom_call.1} parent=35 // pred_check_branch
          %276 = sbr.rel (%p274) target = $region40
        $region39: #{tpu_custom_call.1} parent=35 // pred_region
          %s277 = smul.u32 4, %s16
          %p278 = scmp.lt.s32.totalorder %s277, 7
          %s279 = scalar_select %p278, %s277, 7
          %s280 = smul.addr %s279, 4
          %s281 = smul.addr %s280, 8
          %s282 = scalar_lea.vmem %s1, %s281
        $region40: #{tpu_custom_call.1} parent=35 // pred_fallthru
          _
      $region36: #{tpu_custom_call.1} parent=5 // pred_fallthru
        _
    $region6: #{tpu_custom_call.1} parent=1 // loop_footer
      %s14 = sadd.s32 1, %s10
    $region7: #{tpu_custom_call.1} parent=1 // loop_footer_branch
      %9 = sbr.rel target = $region3
    $region8: #{tpu_custom_call.1} parent=1 // loop_exit
      _
    %283 = vsyncpa [#allocation3], 1
    %s284 = scalar_lea.sflag [#allocation3], 1
    %285 = vsyncpa %s284, 1

</llo_original>
